<compile_context>
chip_gen: v7x
topology: tpu7x:2x2x1
jax: 0.10.0
libtpu: 0.0.40
codegen_flags: <defaults>
</compile_context>

<pallas_src>
import functools

import jax
import jax.numpy as jnp
from jax.experimental import pallas as pl
from jax.experimental.pallas import tpu as pltpu

LANES = 128
SUBLANES = 8
TILE_R_MAX = 2048          # 2048 x 128 f32 = 1 MiB per input block
NCORES = 2                 # v7x megacore split; harmless on single-TC chips


def _dice_ce_kernel(p_ref, p1_ref, l_ref, l1_ref, acc_ref, *,
                    n_tiles, tiles_per_core, tile_r):
    # acc_ref: (64, LANES) f32, resident per core across the reduction axis.
    # Row blocks of 8 (one vreg each):
    #   [ 0: 8) sum bce(preds, labels_thr)   [ 8:16) sum bce(preds1, labels1_thr)
    #   [16:24) sum preds                    [24:32) sum labels_thr
    #   [32:40) sum preds*labels_thr         [40:48) sum preds1
    #   [48:56) sum labels1_thr              [56:64) sum preds1*labels1_thr
    c = pl.program_id(0)
    k = pl.program_id(1)

    @pl.when(k == 0)
    def _():
        acc_ref[...] = jnp.zeros_like(acc_ref)

    t = c * tiles_per_core + k  # global tile index for this core/step

    @pl.when(t < n_tiles)
    def _():
        p = p_ref[...]
        p1 = p1_ref[...]
        l = l_ref[...]
        l1 = l1_ref[...]

        # labels = (labels + labels1) >= 0.999 ? 1 : 0 ; labels1 thresholded too
        labm = (l + l1) >= 0.999
        lab1m = l1 >= 0.999
        lab = labm.astype(jnp.float32)
        lab1 = lab1m.astype(jnp.float32)

        # One log per element per stream (labels are exactly {0,1}); clamp at
        # -100 as nn.BCELoss does.
        bce = -jnp.maximum(jnp.log(jnp.where(labm, p, 1.0 - p)), -100.0)
        bce1 = -jnp.maximum(jnp.log(jnp.where(lab1m, p1, 1.0 - p1)), -100.0)

        nv = tile_r // SUBLANES

        def vreg_sum(x):
            # (tile_r, LANES) -> (SUBLANES, LANES): reduce over full vregs only
            # (the (nv, 8, 128) reshape matches the native tiling -> free view;
            #  all adds are plain VPU vreg adds, no XLU sublane reduce).
            return jnp.sum(x.reshape(nv, SUBLANES, LANES), axis=0)

        partial = jnp.concatenate(
            [vreg_sum(bce), vreg_sum(bce1),
             vreg_sum(p), vreg_sum(lab), vreg_sum(p * lab),
             vreg_sum(p1), vreg_sum(lab1), vreg_sum(p1 * lab1)],
            axis=0)  # (64, LANES)

        acc_ref[...] = acc_ref[...] + partial


def _partial_sums_ref(p, p1, l, l1):
    """Plain-JAX partial sums for the (small) ragged tail."""
    labm = (l + l1) >= 0.999
    lab1m = l1 >= 0.999
    lab = labm.astype(jnp.float32)
    lab1 = lab1m.astype(jnp.float32)
    bce = -jnp.maximum(jnp.log(jnp.where(labm, p, 1.0 - p)), -100.0)
    bce1 = -jnp.maximum(jnp.log(jnp.where(lab1m, p1, 1.0 - p1)), -100.0)
    return jnp.stack([jnp.sum(bce), jnp.sum(bce1),
                      jnp.sum(p), jnp.sum(lab), jnp.sum(p * lab),
                      jnp.sum(p1), jnp.sum(lab1), jnp.sum(p1 * lab1)])


@jax.jit
def dice_ce_loss(preds, preds1, labels, labels1):
    assert preds.shape == labels.shape, (
        f"predict & target shape do not match: {preds.shape} vs {labels.shape}")

    n_elem = preds.size
    pf = preds.reshape(-1).astype(jnp.float32)
    p1f = preds1.reshape(-1).astype(jnp.float32)
    lf = labels.reshape(-1).astype(jnp.float32)
    l1f = labels1.reshape(-1).astype(jnp.float32)

    rows_full = n_elem // LANES
    tile_r = (TILE_R_MAX if rows_full >= TILE_R_MAX
              else (rows_full // SUBLANES) * SUBLANES)
    n_tiles = rows_full // tile_r if tile_r > 0 else 0
    n_main = n_tiles * tile_r * LANES

    sums = jnp.zeros((8,), jnp.float32)

    if n_tiles > 0:
        tiles_per_core = pl.cdiv(n_tiles, NCORES)
        grid = (NCORES, tiles_per_core)

        def in_map(c, k):
            t = c * tiles_per_core + k
            return (jnp.minimum(t, n_tiles - 1), 0)  # clamp out-of-range tiles

        tile_spec = pl.BlockSpec((tile_r, LANES), in_map)
        kernel = functools.partial(_dice_ce_kernel, n_tiles=n_tiles,
                                   tiles_per_core=tiles_per_core,
                                   tile_r=tile_r)

        partials = pl.pallas_call(
            kernel,
            out_shape=jax.ShapeDtypeStruct(
                (NCORES * 8 * SUBLANES, LANES), jnp.float32),
            grid_spec=pltpu.PrefetchScalarGridSpec(
                num_scalar_prefetch=0,
                grid=grid,
                in_specs=[tile_spec, tile_spec, tile_spec, tile_spec],
                out_specs=pl.BlockSpec((8 * SUBLANES, LANES),
                                       lambda c, k: (c, 0)),
            ),
            compiler_params=pltpu.CompilerParams(
                dimension_semantics=("parallel", "arbitrary")),
        )(pf[:n_main].reshape(n_tiles * tile_r, LANES),
          p1f[:n_main].reshape(n_tiles * tile_r, LANES),
          lf[:n_main].reshape(n_tiles * tile_r, LANES),
          l1f[:n_main].reshape(n_tiles * tile_r, LANES))

        # (NCORES, 8 quantities, 8 sublanes, 128 lanes) -> (8,)
        sums = sums + partials.reshape(NCORES, 8, SUBLANES, LANES).sum(
            axis=(0, 2, 3))

    if n_main < n_elem:
        # Ragged tail (< one tile): trivial amount of work, done in plain JAX.
        sums = sums + _partial_sums_ref(pf[n_main:], p1f[n_main:],
                                        lf[n_main:], l1f[n_main:])

    n = jnp.float32(n_elem)
    ce_loss = sums[0] / n
    ce_loss1 = sums[1] / n

    dice_i = (2.0 * sums[4] + 1e-08) / (sums[2] + sums[3] + 1e-08)
    dice_i1 = (2.0 * sums[7] + 1e-08) / (sums[5] + sums[6] + 1e-08)

    dice_i2 = dice_i * 0.3 + dice_i1 * 0.7
    ce_loss2 = ce_loss * 0.3 + ce_loss1 * 0.7

    loss = ce_loss2 - 0.5 * jnp.log(dice_i2)
    loss0 = ce_loss - 0.5 * jnp.log(dice_i)
    loss1 = ce_loss1 - 0.5 * jnp.log(dice_i1)
    return loss, loss0, loss1


if __name__ == "__main__":
    # DiceCeLoss has no learnable parameters (nn.BCELoss only).
    key = jax.random.PRNGKey(0)
    k1, k2, k3, k4 = jax.random.split(key, 4)

    shape = (2, 4, 16, 16)  # small NCHW-like shape
    # predictions must lie in (0, 1) for BCELoss
    preds = jax.nn.sigmoid(jax.random.normal(k1, shape, jnp.float32))
    preds1 = jax.nn.sigmoid(jax.random.normal(k2, shape, jnp.float32))
    # labels are {0, 1} masks
    labels = (jax.random.uniform(k3, shape) > 0.5).astype(jnp.float32)
    labels1 = (jax.random.uniform(k4, shape) > 0.5).astype(jnp.float32)

    loss, loss0, loss1 = dice_ce_loss(preds, preds1, labels, labels1)
    jax.block_until_ready((loss, loss0, loss1))
    print("KERNEL_OK")
</pallas_src>

<mosaic_0001>
module attributes {stable_mosaic.version = 11 : i64} {
  func.func @_dice_ce_kernel(%arg0: i32, %arg1: i32, %arg2: memref<16x128xf32, #tpu.memory_space<vmem>>, %arg3: memref<16x128xf32, #tpu.memory_space<vmem>>, %arg4: memref<16x128xf32, #tpu.memory_space<vmem>>, %arg5: memref<16x128xf32, #tpu.memory_space<vmem>>, %arg6: memref<64x128xf32, #tpu.memory_space<vmem>>) attributes {dimension_semantics = [#tpu.dimension_semantics<parallel>, #tpu.dimension_semantics<arbitrary>], iteration_bounds = array<i64: 2, 1>, scalar_prefetch = 0 : i64, scratch_operands = 0 : i64, tpu.core_type = #tpu.core_type<tc>, window_params = [{transform_indices = @transform_0, window_bounds = array<i64: 16, 128>}, {transform_indices = @transform_1, window_bounds = array<i64: 16, 128>}, {transform_indices = @transform_2, window_bounds = array<i64: 16, 128>}, {transform_indices = @transform_3, window_bounds = array<i64: 16, 128>}, {transform_indices = @transform_4, window_bounds = array<i64: 64, 128>}]} {
    %c0_i32 = arith.constant 0 : i32
    %0 = arith.cmpi eq, %arg1, %c0_i32 : i32
    %1 = arith.extui %0 : i1 to i32
    %c0_i32_0 = arith.constant 0 : i32
    %2 = arith.cmpi ne, %1, %c0_i32_0 : i32
    scf.if %2 {
      %cst = arith.constant 0.000000e+00 : f32
      %8 = vector.broadcast %cst : f32 to vector<64x128xf32>
      %c0 = arith.constant 0 : index
      %c0_3 = arith.constant 0 : index
      %9 = vector.load %arg6[%c0, %c0_3] : memref<64x128xf32, #tpu.memory_space<vmem>>, vector<64x128xf32>
      tpu.vector_store %arg6[%c0, %c0_3], %8 {strides = array<i32>} : memref<64x128xf32, #tpu.memory_space<vmem>>, vector<64x128xf32>,
    } else {
    }
    %c1_i32 = arith.constant 1 : i32
    %3 = arith.muli %arg0, %c1_i32 : i32
    %4 = arith.addi %3, %arg1 : i32
    %c1_i32_1 = arith.constant 1 : i32
    %5 = arith.cmpi slt, %4, %c1_i32_1 : i32
    %6 = arith.extui %5 : i1 to i32
    %c0_i32_2 = arith.constant 0 : i32
    %7 = arith.cmpi ne, %6, %c0_i32_2 : i32
    scf.if %7 {
      %c0 = arith.constant 0 : index
      %c0_3 = arith.constant 0 : index
      %8 = vector.load %arg2[%c0, %c0_3] : memref<16x128xf32, #tpu.memory_space<vmem>>, vector<16x128xf32>
      %c0_4 = arith.constant 0 : index
      %c0_5 = arith.constant 0 : index
      %9 = vector.load %arg3[%c0_4, %c0_5] : memref<16x128xf32, #tpu.memory_space<vmem>>, vector<16x128xf32>
      %c0_6 = arith.constant 0 : index
      %c0_7 = arith.constant 0 : index
      %10 = vector.load %arg4[%c0_6, %c0_7] : memref<16x128xf32, #tpu.memory_space<vmem>>, vector<16x128xf32>
      %c0_8 = arith.constant 0 : index
      %c0_9 = arith.constant 0 : index
      %11 = vector.load %arg5[%c0_8, %c0_9] : memref<16x128xf32, #tpu.memory_space<vmem>>, vector<16x128xf32>
      %12 = arith.addf %10, %11 : vector<16x128xf32>
      %cst = arith.constant 9.990000e-01 : f32
      %13 = vector.broadcast %cst : f32 to vector<16x128xf32>
      %14 = arith.cmpf oge, %12, %13 : vector<16x128xf32>
      %cst_10 = arith.constant 9.990000e-01 : f32
      %15 = vector.broadcast %cst_10 : f32 to vector<16x128xf32>
      %16 = arith.cmpf oge, %11, %15 : vector<16x128xf32>
      %17 = arith.extui %14 : vector<16x128xi1> to vector<16x128xi32>
      %18 = arith.sitofp %17 : vector<16x128xi32> to vector<16x128xf32>
      %19 = arith.extui %16 : vector<16x128xi1> to vector<16x128xi32>
      %20 = arith.sitofp %19 : vector<16x128xi32> to vector<16x128xf32>
      %cst_11 = arith.constant 1.000000e+00 : f32
      %21 = vector.broadcast %cst_11 : f32 to vector<16x128xf32>
      %22 = arith.subf %21, %8 : vector<16x128xf32>
      %23 = arith.select %14, %8, %22 : vector<16x128xi1>, vector<16x128xf32>
      %24 = math.log %23 : vector<16x128xf32>
      %cst_12 = arith.constant -1.000000e+02 : f32
      %25 = vector.broadcast %cst_12 : f32 to vector<16x128xf32>
      %26 = arith.maximumf %24, %25 : vector<16x128xf32>
      %cst_13 = arith.constant 0.000000e+00 : f32
      %27 = vector.broadcast %cst_13 : f32 to vector<16x128xf32>
      %28 = arith.subf %27, %26 : vector<16x128xf32>
      %cst_14 = arith.constant 1.000000e+00 : f32
      %29 = vector.broadcast %cst_14 : f32 to vector<16x128xf32>
      %30 = arith.subf %29, %9 : vector<16x128xf32>
      %31 = arith.select %16, %9, %30 : vector<16x128xi1>, vector<16x128xf32>
      %32 = math.log %31 : vector<16x128xf32>
      %cst_15 = arith.constant -1.000000e+02 : f32
      %33 = vector.broadcast %cst_15 : f32 to vector<16x128xf32>
      %34 = arith.maximumf %32, %33 : vector<16x128xf32>
      %cst_16 = arith.constant 0.000000e+00 : f32
      %35 = vector.broadcast %cst_16 : f32 to vector<16x128xf32>
      %36 = arith.subf %35, %34 : vector<16x128xf32>
      %37 = vector.shape_cast %28 : vector<16x128xf32> to vector<2x8x128xf32>
      %cst_17 = arith.constant dense<0.000000e+00> : vector<8x128xf32>
      %38 = vector.multi_reduction <add>, %37, %cst_17 [0] : vector<2x8x128xf32> to vector<8x128xf32>
      %39 = vector.shape_cast %36 : vector<16x128xf32> to vector<2x8x128xf32>
      %cst_18 = arith.constant dense<0.000000e+00> : vector<8x128xf32>
      %40 = vector.multi_reduction <add>, %39, %cst_18 [0] : vector<2x8x128xf32> to vector<8x128xf32>
      %41 = vector.shape_cast %8 : vector<16x128xf32> to vector<2x8x128xf32>
      %cst_19 = arith.constant dense<0.000000e+00> : vector<8x128xf32>
      %42 = vector.multi_reduction <add>, %41, %cst_19 [0] : vector<2x8x128xf32> to vector<8x128xf32>
      %43 = vector.shape_cast %18 : vector<16x128xf32> to vector<2x8x128xf32>
      %cst_20 = arith.constant dense<0.000000e+00> : vector<8x128xf32>
      %44 = vector.multi_reduction <add>, %43, %cst_20 [0] : vector<2x8x128xf32> to vector<8x128xf32>
      %45 = arith.mulf %8, %18 : vector<16x128xf32>
      %46 = vector.shape_cast %45 : vector<16x128xf32> to vector<2x8x128xf32>
      %cst_21 = arith.constant dense<0.000000e+00> : vector<8x128xf32>
      %47 = vector.multi_reduction <add>, %46, %cst_21 [0] : vector<2x8x128xf32> to vector<8x128xf32>
      %48 = vector.shape_cast %9 : vector<16x128xf32> to vector<2x8x128xf32>
      %cst_22 = arith.constant dense<0.000000e+00> : vector<8x128xf32>
      %49 = vector.multi_reduction <add>, %48, %cst_22 [0] : vector<2x8x128xf32> to vector<8x128xf32>
      %50 = vector.shape_cast %20 : vector<16x128xf32> to vector<2x8x128xf32>
      %cst_23 = arith.constant dense<0.000000e+00> : vector<8x128xf32>
      %51 = vector.multi_reduction <add>, %50, %cst_23 [0] : vector<2x8x128xf32> to vector<8x128xf32>
      %52 = arith.mulf %9, %20 : vector<16x128xf32>
      %53 = vector.shape_cast %52 : vector<16x128xf32> to vector<2x8x128xf32>
      %cst_24 = arith.constant dense<0.000000e+00> : vector<8x128xf32>
      %54 = vector.multi_reduction <add>, %53, %cst_24 [0] : vector<2x8x128xf32> to vector<8x128xf32>
      %55 = tpu.concatenate %38, %40, %42, %44, %47, %49, %51, %54 in 0 : vector<8x128xf32>, vector<8x128xf32>, vector<8x128xf32>, vector<8x128xf32>, vector<8x128xf32>, vector<8x128xf32>, vector<8x128xf32>, vector<8x128xf32> -> vector<64x128xf32>
      %c0_25 = arith.constant 0 : index
      %c0_26 = arith.constant 0 : index
      %56 = vector.load %arg6[%c0_25, %c0_26] : memref<64x128xf32, #tpu.memory_space<vmem>>, vector<64x128xf32>
      %57 = arith.addf %56, %55 : vector<64x128xf32>
      %c0_27 = arith.constant 0 : index
      %c0_28 = arith.constant 0 : index
      %58 = vector.load %arg6[%c0_27, %c0_28] : memref<64x128xf32, #tpu.memory_space<vmem>>, vector<64x128xf32>
      tpu.vector_store %arg6[%c0_27, %c0_28], %57 {strides = array<i32>} : memref<64x128xf32, #tpu.memory_space<vmem>>, vector<64x128xf32>,
    } else {
    }
    return
  }
  func.func @transform_0(%arg0: i32, %arg1: i32) -> (i32, i32) {
    %c1_i32 = arith.constant 1 : i32
    %0 = arith.muli %arg0, %c1_i32 : i32
    %1 = arith.addi %0, %arg1 : i32
    %c0_i32 = arith.constant 0 : i32
    %2 = arith.minsi %1, %c0_i32 : i32
    %c0_i32_0 = arith.constant 0 : i32
    %c0_i32_1 = arith.constant 0 : i32
    return %2, %c0_i32_0 : i32, i32
  }
  func.func @transform_1(%arg0: i32, %arg1: i32) -> (i32, i32) {
    %c1_i32 = arith.constant 1 : i32
    %0 = arith.muli %arg0, %c1_i32 : i32
    %1 = arith.addi %0, %arg1 : i32
    %c0_i32 = arith.constant 0 : i32
    %2 = arith.minsi %1, %c0_i32 : i32
    %c0_i32_0 = arith.constant 0 : i32
    %c0_i32_1 = arith.constant 0 : i32
    return %2, %c0_i32_0 : i32, i32
  }
  func.func @transform_2(%arg0: i32, %arg1: i32) -> (i32, i32) {
    %c1_i32 = arith.constant 1 : i32
    %0 = arith.muli %arg0, %c1_i32 : i32
    %1 = arith.addi %0, %arg1 : i32
    %c0_i32 = arith.constant 0 : i32
    %2 = arith.minsi %1, %c0_i32 : i32
    %c0_i32_0 = arith.constant 0 : i32
    %c0_i32_1 = arith.constant 0 : i32
    return %2, %c0_i32_0 : i32, i32
  }
  func.func @transform_3(%arg0: i32, %arg1: i32) -> (i32, i32) {
    %c1_i32 = arith.constant 1 : i32
    %0 = arith.muli %arg0, %c1_i32 : i32
    %1 = arith.addi %0, %arg1 : i32
    %c0_i32 = arith.constant 0 : i32
    %2 = arith.minsi %1, %c0_i32 : i32
    %c0_i32_0 = arith.constant 0 : i32
    %c0_i32_1 = arith.constant 0 : i32
    return %2, %c0_i32_0 : i32, i32
  }
  func.func @transform_4(%arg0: i32, %arg1: i32) -> (i32, i32) {
    %c0_i32 = arith.constant 0 : i32
    %c0_i32_0 = arith.constant 0 : i32
    return %arg0, %c0_i32 : i32, i32
  }
}

</mosaic_0001>

<llo_original>
// kernel: dice_ce_loss.1
$region0: #{dice_ce_loss.1}
  #allocation0 [shape = 'u32[]', space=smem, size = 0x4, offset = 0x4, fixed_abs, tag = 'smem constant byte address 0x4 - core index']
  #allocation1 [shape = 'u32[144,128]{1,0:T(1,128)}', space=vmem, size = 0x12000, scoped, tag = 'internal scratch']
  %s0 = inlined_call_operand.vmem [shape: f32[16,128], index: 0, kind: input, shape index: {}]
  %s1 = inlined_call_operand.vmem [shape: f32[16,128], index: 1, kind: input, shape index: {}]
  %s2 = inlined_call_operand.vmem [shape: f32[16,128], index: 2, kind: input, shape index: {}]
  %s3 = inlined_call_operand.vmem [shape: f32[16,128], index: 3, kind: input, shape index: {}]
  %s4 = inlined_call_operand.vmem [shape: f32[128,128], index: 4, kind: output, shape index: {}]
  %s5 = sld [smem:[#allocation0]]
  $region57: #{dice_ce_loss.1} parent=0
    _
  %s7 = ssub.s32 1, %s5
  %s8 = scalar_select 0, %s7, %s5
  loop: start=0, step=1, limit=4
  $region2: #{dice_ce_loss.1} parent=0 // loop_pre_header
    _
  $region3: #{dice_ce_loss.1} parent=0 // loop_header
    %s10 = sphi 0, %s14
    %p11 = scmp.ge.s32.totalorder %s10, 4
    %s17 = sphi 0, %s29
    %s18 = sphi 0, %s25
    %s19 = sphi 0, %s17
    %s20 = sphi 0, %s18
    %s21 = sphi 0, %s19
    %s22 = sphi 0, %s20
    %s38 = sphi 0, %s40
    %s41 = sphi 0, %s38
    %s42 = sphi 0, %s41
    %s58 = sphi 0, %s42
    %s70 = sphi 0, %s72
    %s73 = sphi 0, %s70
    %s74 = sphi 0, %s73
    %s90 = sphi 0, %s74
    %s102 = sphi 0, %s104
    %s105 = sphi 0, %s102
    %s106 = sphi 0, %s105
    %s122 = sphi 0, %s106
    %s134 = sphi 0, %s136
    %s137 = sphi 0, %s134
    %s138 = sphi 0, %s137
    %s154 = sphi 0, %s138
    %s160 = sphi 0, %s162
    %s163 = sphi 0, %s160
    %s164 = sphi 0, %s163
    %s180 = sphi 0, %s164
  $region4: #{dice_ce_loss.1} parent=0 // loop_header_branch
    %13 = sbr.rel (%p11) target = $region8
  $region5: #{dice_ce_loss.1} parent=0 // loop_body
    %s15 = ssub.s32 %s10, 1
    %s16 = ssub.s32 %s10, 2
    %s23 = sadd.s32 1, %s18
    %p24 = scmp.ge.s32.totalorder %s23, 1
    %s25 = scalar_select %p24, 0, %s23
    %s26 = sadd.s32 1, %s17
    %s27 = scalar_select %p24, %s26, %s17
    %p28 = scmp.ge.s32.totalorder %s27, 2
    %s29 = scalar_select %p28, 0, %s27
    %s30 = sadd.s32 %s17, %s18
    %p31 = scmp.lt.s32.totalorder %s30, 0
    %s32 = scalar_select %p31, %s30, 0
    %s33 = sadd.s32 %s29, %s25
    %p34 = scmp.lt.s32.totalorder %s33, 0
    %s35 = scalar_select %p34, %s33, 0
    %s36 = ssub.s32 %s32, %s35
    %p37 = scmp.eq.s32.totalorder %s36, 0
    %s39 = sadd.s32 %s38, 1
    %s40 = scalar_select %p37, %s38, %s39
    %p43 = pneg %p37
    %p44 = scmp.eq.s32.totalorder %s10, 1
    %p45 = por %p43, %p44
    %p46 = scmp.ne.s32.totalorder %s38, %s41
    %p47 = scmp.eq.s32.totalorder %s10, 0
    %p48 = por %p46, %p47
    %p49 = scmp.ne.s32.totalorder %s38, %s41
    %p50 = scmp.eq.s32.totalorder %s15, 1
    %p51 = por %p49, %p50
    %p52 = scmp.ne.s32.totalorder %s41, %s42
    %p53 = scmp.eq.s32.totalorder %s15, 0
    %p54 = por %p52, %p53
    %p55 = scmp.ne.s32.totalorder %s41, %s42
    %p56 = scmp.eq.s32.totalorder %s16, 1
    %p57 = por %p55, %p56
    %p59 = scmp.ne.s32.totalorder %s42, %s58
    %p60 = scmp.eq.s32.totalorder %s16, 0
    %p61 = por %p59, %p60
    %s62 = sadd.s32 %s17, %s18
    %p63 = scmp.lt.s32.totalorder %s62, 0
    %s64 = scalar_select %p63, %s62, 0
    %s65 = sadd.s32 %s29, %s25
    %p66 = scmp.lt.s32.totalorder %s65, 0
    %s67 = scalar_select %p66, %s65, 0
    %s68 = ssub.s32 %s64, %s67
    %p69 = scmp.eq.s32.totalorder %s68, 0
    %s71 = sadd.s32 %s70, 1
    %s72 = scalar_select %p69, %s70, %s71
    %p75 = pneg %p69
    %p76 = scmp.eq.s32.totalorder %s10, 1
    %p77 = por %p75, %p76
    %p78 = scmp.ne.s32.totalorder %s70, %s73
    %p79 = scmp.eq.s32.totalorder %s10, 0
    %p80 = por %p78, %p79
    %p81 = scmp.ne.s32.totalorder %s70, %s73
    %p82 = scmp.eq.s32.totalorder %s15, 1
    %p83 = por %p81, %p82
    %p84 = scmp.ne.s32.totalorder %s73, %s74
    %p85 = scmp.eq.s32.totalorder %s15, 0
    %p86 = por %p84, %p85
    %p87 = scmp.ne.s32.totalorder %s73, %s74
    %p88 = scmp.eq.s32.totalorder %s16, 1
    %p89 = por %p87, %p88
    %p91 = scmp.ne.s32.totalorder %s74, %s90
    %p92 = scmp.eq.s32.totalorder %s16, 0
    %p93 = por %p91, %p92
    %s94 = sadd.s32 %s17, %s18
    %p95 = scmp.lt.s32.totalorder %s94, 0
    %s96 = scalar_select %p95, %s94, 0
    %s97 = sadd.s32 %s29, %s25
    %p98 = scmp.lt.s32.totalorder %s97, 0
    %s99 = scalar_select %p98, %s97, 0
    %s100 = ssub.s32 %s96, %s99
    %p101 = scmp.eq.s32.totalorder %s100, 0
    %s103 = sadd.s32 %s102, 1
    %s104 = scalar_select %p101, %s102, %s103
    %p107 = pneg %p101
    %p108 = scmp.eq.s32.totalorder %s10, 1
    %p109 = por %p107, %p108
    %p110 = scmp.ne.s32.totalorder %s102, %s105
    %p111 = scmp.eq.s32.totalorder %s10, 0
    %p112 = por %p110, %p111
    %p113 = scmp.ne.s32.totalorder %s102, %s105
    %p114 = scmp.eq.s32.totalorder %s15, 1
    %p115 = por %p113, %p114
    %p116 = scmp.ne.s32.totalorder %s105, %s106
    %p117 = scmp.eq.s32.totalorder %s15, 0
    %p118 = por %p116, %p117
    %p119 = scmp.ne.s32.totalorder %s105, %s106
    %p120 = scmp.eq.s32.totalorder %s16, 1
    %p121 = por %p119, %p120
    %p123 = scmp.ne.s32.totalorder %s106, %s122
    %p124 = scmp.eq.s32.totalorder %s16, 0
    %p125 = por %p123, %p124
    %s126 = sadd.s32 %s17, %s18
    %p127 = scmp.lt.s32.totalorder %s126, 0
    %s128 = scalar_select %p127, %s126, 0
    %s129 = sadd.s32 %s29, %s25
    %p130 = scmp.lt.s32.totalorder %s129, 0
    %s131 = scalar_select %p130, %s129, 0
    %s132 = ssub.s32 %s128, %s131
    %p133 = scmp.eq.s32.totalorder %s132, 0
    %s135 = sadd.s32 %s134, 1
    %s136 = scalar_select %p133, %s134, %s135
    %p139 = pneg %p133
    %p140 = scmp.eq.s32.totalorder %s10, 1
    %p141 = por %p139, %p140
    %p142 = scmp.ne.s32.totalorder %s134, %s137
    %p143 = scmp.eq.s32.totalorder %s10, 0
    %p144 = por %p142, %p143
    %p145 = scmp.ne.s32.totalorder %s134, %s137
    %p146 = scmp.eq.s32.totalorder %s15, 1
    %p147 = por %p145, %p146
    %p148 = scmp.ne.s32.totalorder %s137, %s138
    %p149 = scmp.eq.s32.totalorder %s15, 0
    %p150 = por %p148, %p149
    %p151 = scmp.ne.s32.totalorder %s137, %s138
    %p152 = scmp.eq.s32.totalorder %s16, 1
    %p153 = por %p151, %p152
    %p155 = scmp.ne.s32.totalorder %s138, %s154
    %p156 = scmp.eq.s32.totalorder %s16, 0
    %p157 = por %p155, %p156
    %s158 = ssub.s32 %s17, %s29
    %p159 = scmp.eq.s32.totalorder %s158, 0
    %s161 = sadd.s32 %s160, 1
    %s162 = scalar_select %p159, %s160, %s161
    %p165 = pneg %p159
    %p166 = scmp.eq.s32.totalorder %s10, 1
    %p167 = por %p165, %p166
    %p168 = scmp.ne.s32.totalorder %s160, %s163
    %p169 = scmp.eq.s32.totalorder %s10, 0
    %p170 = por %p168, %p169
    %p171 = scmp.ne.s32.totalorder %s160, %s163
    %p172 = scmp.eq.s32.totalorder %s15, 1
    %p173 = por %p171, %p172
    %p174 = scmp.ne.s32.totalorder %s163, %s164
    %p175 = scmp.eq.s32.totalorder %s15, 0
    %p176 = por %p174, %p175
    %p177 = scmp.ne.s32.totalorder %s163, %s164
    %p178 = scmp.eq.s32.totalorder %s16, 1
    %p179 = por %p177, %p178
    %p181 = scmp.ne.s32.totalorder %s164, %s180
    %p182 = scmp.eq.s32.totalorder %s16, 0
    %p183 = por %p181, %p182
    %p184 = scmp.le.s32.totalorder 1, %s10
    %p185 = scmp.lt.s32.totalorder %s10, 3
    %p186 = pnand %p184, %p185
    %p187 = pneg %p186
    // Predicated region
    $region9: #{dice_ce_loss.1} parent=5 // pred_check
      _
    $region10: #{dice_ce_loss.1} parent=5 // pred_check_branch
      %189 = sbr.rel (%p186) target = $region12
    $region11: #{dice_ce_loss.1} parent=5 // pred_region
      %s190 = ssub.s32 %s10, 1
    $region12: #{dice_ce_loss.1} parent=5 // pred_fallthru
      _
    %p191 = scmp.lt.s32.totalorder %s10, 2
    // Predicated region
    $region13: #{dice_ce_loss.1} parent=5 // pred_check
      %p192 = pneg %p191
    $region14: #{dice_ce_loss.1} parent=5 // pred_check_branch
      %194 = sbr.rel (%p192) target = $region16
    $region15: #{dice_ce_loss.1} parent=5 // pred_region
      // Predicated region
      $region17: #{dice_ce_loss.1} parent=15 // pred_check
        %p195 = pneg %p48
      $region18: #{dice_ce_loss.1} parent=15 // pred_check_branch
        %197 = sbr.rel (%p195) target = $region20
      $region19: #{dice_ce_loss.1} parent=15 // pred_region
        %s198 = sadd.s32 %s17, %s18
        %p199 = scmp.lt.s32.totalorder %s198, 0
        %s200 = scalar_select %p199, %s198, 0
        %s201 = smul.u32 2, %s200
        %p202 = scmp.lt.s32.totalorder %s201, 1
        %s203 = scalar_select %p202, %s201, 1
        %s204 = smul.addr %s203, 8
        %s205 = scalar_lea.vmem %s0, %s204
        %s206 = sadd.s32 %s17, %s18
        %p207 = scmp.lt.s32.totalorder %s206, 0
        %s208 = scalar_select %p207, %s206, 0
        %s209 = smul.u32 2, %s208
      $region20: #{dice_ce_loss.1} parent=15 // pred_fallthru
        _
      // Predicated region
      $region21: #{dice_ce_loss.1} parent=15 // pred_check
        %p210 = pneg %p80
      $region22: #{dice_ce_loss.1} parent=15 // pred_check_branch
        %212 = sbr.rel (%p210) target = $region24
      $region23: #{dice_ce_loss.1} parent=15 // pred_region
        %s213 = sadd.s32 %s17, %s18
        %p214 = scmp.lt.s32.totalorder %s213, 0
        %s215 = scalar_select %p214, %s213, 0
        %s216 = smul.u32 2, %s215
        %p217 = scmp.lt.s32.totalorder %s216, 1
        %s218 = scalar_select %p217, %s216, 1
        %s219 = smul.addr %s218, 8
        %s220 = scalar_lea.vmem %s1, %s219
        %s221 = sadd.s32 %s17, %s18
        %p222 = scmp.lt.s32.totalorder %s221, 0
        %s223 = scalar_select %p222, %s221, 0
        %s224 = smul.u32 2, %s223
      $region24: #{dice_ce_loss.1} parent=15 // pred_fallthru
        _
      // Predicated region
      $region25: #{dice_ce_loss.1} parent=15 // pred_check
        %p225 = pneg %p112
      $region26: #{dice_ce_loss.1} parent=15 // pred_check_branch
        %227 = sbr.rel (%p225) target = $region28
      $region27: #{dice_ce_loss.1} parent=15 // pred_region
        %s228 = sadd.s32 %s17, %s18
        %p229 = scmp.lt.s32.totalorder %s228, 0
        %s230 = scalar_select %p229, %s228, 0
        %s231 = smul.u32 2, %s230
        %p232 = scmp.lt.s32.totalorder %s231, 1
        %s233 = scalar_select %p232, %s231, 1
        %s234 = smul.addr %s233, 8
        %s235 = scalar_lea.vmem %s2, %s234
        %s236 = sadd.s32 %s17, %s18
        %p237 = scmp.lt.s32.totalorder %s236, 0
        %s238 = scalar_select %p237, %s236, 0
        %s239 = smul.u32 2, %s238
      $region28: #{dice_ce_loss.1} parent=15 // pred_fallthru
        _
      // Predicated region
      $region29: #{dice_ce_loss.1} parent=15 // pred_check
        %p240 = pneg %p144
      $region30: #{dice_ce_loss.1} parent=15 // pred_check_branch
        %242 = sbr.rel (%p240) target = $region32
      $region31: #{dice_ce_loss.1} parent=15 // pred_region
        %s243 = sadd.s32 %s17, %s18
        %p244 = scmp.lt.s32.totalorder %s243, 0
        %s245 = scalar_select %p244, %s243, 0
        %s246 = smul.u32 2, %s245
        %p247 = scmp.lt.s32.totalorder %s246, 1
        %s248 = scalar_select %p247, %s246, 1
        %s249 = smul.addr %s248, 8
        %s250 = scalar_lea.vmem %s3, %s249
        %s251 = sadd.s32 %s17, %s18
        %p252 = scmp.lt.s32.totalorder %s251, 0
        %s253 = scalar_select %p252, %s251, 0
        %s254 = smul.u32 2, %s253
      $region32: #{dice_ce_loss.1} parent=15 // pred_fallthru
        _
    $region16: #{dice_ce_loss.1} parent=5 // pred_fallthru
      _
    %p255 = scmp.le.s32.totalorder 1, %s10
    %p256 = scmp.lt.s32.totalorder %s10, 3
    %p257 = pnand %p255, %p256
    %p258 = pneg %p257
    // Predicated region
    $region33: #{dice_ce_loss.1} parent=5 // pred_check
      _
    $region34: #{dice_ce_loss.1} parent=5 // pred_check_branch
      %260 = sbr.rel (%p257) target = $region36
    $region35: #{dice_ce_loss.1} parent=5 // pred_region
      %s261 = ssub.s32 %s10, 1
      %s262 = sadd.s32 %s19, %s20
      %p263 = scmp.lt.s32.totalorder %s262, 0
      %s264 = scalar_select %p263, %s262, 0
      %s265 = smul.u32 2, %s264
      %p266 = scmp.lt.s32.totalorder %s265, 1
      %s267 = scalar_select %p266, %s265, 1
      %s268 = smul.addr %s267, 8
      %s269 = scalar_lea.vmem %s0, %s268
      %p270 = pneg %p54
      %p271 = pneg %p51
      %s272 = sadd.s32 %s19, %s20
      %p273 = scmp.lt.s32.totalorder %s272, 0
      %s274 = scalar_select %p273, %s272, 0
      %s275 = smul.u32 2, %s274
      %p276 = scmp.lt.s32.totalorder %s275, 1
      %s277 = scalar_select %p276, %s275, 1
      %s278 = smul.addr %s277, 8
      %s279 = scalar_lea.vmem %s1, %s278
      %p280 = pneg %p86
      %p281 = pneg %p83
      %s282 = sadd.s32 %s19, %s20
      %p283 = scmp.lt.s32.totalorder %s282, 0
      %s284 = scalar_select %p283, %s282, 0
      %s285 = smul.u32 2, %s284
      %p286 = scmp.lt.s32.totalorder %s285, 1
      %s287 = scalar_select %p286, %s285, 1
      %s288 = smul.addr %s287, 8
      %s289 = scalar_lea.vmem %s2, %s288
      %p290 = pneg %p118
      %p291 = pneg %p115
      %s292 = sadd.s32 %s19, %s20
      %p293 = scmp.lt.s32.totalorder %s292, 0
      %s294 = scalar_select %p293, %s292, 0
      %s295 = smul.u32 2, %s294
      %p296 = scmp.lt.s32.totalorder %s295, 1
      %s297 = scalar_select %p296, %s295, 1
      %s298 = smul.addr %s297, 8
      %s299 = scalar_lea.vmem %s3, %s298
      %p300 = pneg %p150
      %p301 = pneg %p147
      %p302 = pneg %p176
      %p303 = pneg %p173
      %s304 = smul.u32 8, %s19
      %p305 = scmp.lt.s32.totalorder %s304, 15
      %s306 = scalar_select %p305, %s304, 15
      %s307 = smul.addr %s306, 8
      %s308 = scalar_lea.vmem %s4, %s307
      %s309 = sadd.s32 %s19, %s20
      %p310 = scmp.lt.s32.totalorder %s309, 0
      %s311 = scalar_select %p310, %s309, 0
      %s312 = smul.u32 2, %s311
      %p313 = scmp.lt.s32.totalorder %s312, 1
      %s314 = scalar_select %p313, %s312, 1
      %s315 = smul.addr %s314, 8
      %s316 = scalar_lea.vmem %s0, %s315
      %s317 = sadd.s32 %s19, %s20
      %p318 = scmp.lt.s32.totalorder %s317, 0
      %s319 = scalar_select %p318, %s317, 0
      %s320 = smul.u32 2, %s319
      %s321 = sadd.s32 %s19, %s20
      %p322 = scmp.lt.s32.totalorder %s321, 0
      %s323 = scalar_select %p322, %s321, 0
      %s324 = smul.u32 2, %s323
      %p325 = scmp.lt.s32.totalorder %s324, 1
      %s326 = scalar_select %p325, %s324, 1
      %s327 = smul.addr %s326, 8
      %s328 = scalar_lea.vmem %s1, %s327
      %s329 = sadd.s32 %s19, %s20
      %p330 = scmp.lt.s32.totalorder %s329, 0
      %s331 = scalar_select %p330, %s329, 0
      %s332 = smul.u32 2, %s331
      %s333 = sadd.s32 %s19, %s20
      %p334 = scmp.lt.s32.totalorder %s333, 0
      %s335 = scalar_select %p334, %s333, 0
      %s336 = smul.u32 2, %s335
      %p337 = scmp.lt.s32.totalorder %s336, 1
      %s338 = scalar_select %p337, %s336, 1
      %s339 = smul.addr %s338, 8
      %s340 = scalar_lea.vmem %s2, %s339
      %s341 = sadd.s32 %s19, %s20
      %p342 = scmp.lt.s32.totalorder %s341, 0
      %s343 = scalar_select %p342, %s341, 0
      %s344 = smul.u32 2, %s343
      %s345 = sadd.s32 %s19, %s20
      %p346 = scmp.lt.s32.totalorder %s345, 0
      %s347 = scalar_select %p346, %s345, 0
      %s348 = smul.u32 2, %s347
      %p349 = scmp.lt.s32.totalorder %s348, 1
      %s350 = scalar_select %p349, %s348, 1
      %s351 = smul.addr %s350, 8
      %s352 = scalar_lea.vmem %s3, %s351
      %s353 = sadd.s32 %s19, %s20
      %p354 = scmp.lt.s32.totalorder %s353, 0
      %s355 = scalar_select %p354, %s353, 0
      %s356 = smul.u32 2, %s355
      %s357 = smul.u32 8, %s19
      %p358 = scmp.lt.s32.totalorder %s357, 15
      %s359 = scalar_select %p358, %s357, 15
      %s360 = smul.addr %s359, 8
      %s361 = scalar_lea.vmem %s4, %s360
      %s362 = smul.u32 8, %s19
      %p363 = scmp.eq.s32.totalorder %s20, 0
      // Predicated region
      $region37: #{dice_ce_loss.1} parent=35 // pred_check
        %p364 = pneg %p363
      $region38: #{dice_ce_loss.1} parent=35 // pred_check_branch
        %366 = sbr.rel (%p364) target = $region40
      $region39: #{dice_ce_loss.1} parent=35 // pred_region
        %367 = vst [vmem:[%s361] sm:$0xff] 0.0
        %368 = vst [vmem:[%s361 + $0x8] sm:$0xff] 0.0
        %369 = vst [vmem:[%s361 + $0x10] sm:$0xff] 0.0
        %370 = vst [vmem:[%s361 + $0x18] sm:$0xff] 0.0
        %371 = vst [vmem:[%s361 + $0x20] sm:$0xff] 0.0
        %372 = vst [vmem:[%s361 + $0x28] sm:$0xff] 0.0
        %373 = vst [vmem:[%s361 + $0x30] sm:$0xff] 0.0
        %374 = vst [vmem:[%s361 + $0x38] sm:$0xff] 0.0
      $region40: #{dice_ce_loss.1} parent=35 // pred_fallthru
        _
      %s375 = sadd.s32 %s19, %s20
      %p376 = scmp.lt.s32.totalorder %s375, 1
      // Predicated region
      $region41: #{dice_ce_loss.1} parent=35 // pred_check
        %p377 = pneg %p376
      $region42: #{dice_ce_loss.1} parent=35 // pred_check_branch
        %379 = sbr.rel (%p377) target = $region44
      $region43: #{dice_ce_loss.1} parent=35 // pred_region
        %v380 = vld [vmem:[%s316] sm:$0xff]
        %v381 = vld [vmem:[%s316 + $0x8] sm:$0xff]
        %v382 = vld [vmem:[%s328] sm:$0xff]
        %v383 = vld [vmem:[%s328 + $0x8] sm:$0xff]
        %v384 = vld [vmem:[%s340] sm:$0xff]
        %v385 = vld [vmem:[%s340 + $0x8] sm:$0xff]
        %v386 = vld [vmem:[%s352] sm:$0xff]
        %v387 = vld [vmem:[%s352 + $0x8] sm:$0xff]
        %v388 = vadd.f32 %v384, %v386
        %v389 = vadd.f32 %v385, %v387
        %vm390 = vcmp.ge.f32.partialorder %v388, 0.999
        %vm391 = vcmp.ge.f32.partialorder %v389, 0.999
        %vm392 = vcmp.ge.f32.partialorder %v386, 0.999
        %vm393 = vcmp.ge.f32.partialorder %v387, 0.999
        %v394 = vsel %vm390, 1, 0
        %v395 = vsel %vm391, 1, 0
        %v396 = vcvt.s32.f32 %v394
        %v397 = vcvt.s32.f32 %v395
        %v398 = vsel %vm392, 1, 0
        %v399 = vsel %vm393, 1, 0
        %v400 = vcvt.s32.f32 %v398
        %v401 = vcvt.s32.f32 %v399
        %v402 = vsub.f32 1.0, %v380
        %v403 = vsub.f32 1.0, %v381
        %v404 = vsel %vm390, %v380, %v402
        %v405 = vsel %vm391, %v381, %v403
        %v406 = vlog2.pop %v404
        %v407 = vmul.f32 %v406, 0.6931472
        %v408 = vlog2.pop %v405
        %v409 = vmul.f32 %v408, 0.6931472
        %v410 = vmax.f32 %v407, -100.0
        %v411 = vmax.f32 %v409, -100.0
        %v412 = vsub.f32 0.0, %v410
        %v413 = vsub.f32 0.0, %v411
        %v414 = vsub.f32 1.0, %v382
        %v415 = vsub.f32 1.0, %v383
        %v416 = vsel %vm392, %v382, %v414
        %v417 = vsel %vm393, %v383, %v415
        %v418 = vlog2.pop %v416
        %v419 = vmul.f32 %v418, 0.6931472
        %v420 = vlog2.pop %v417
        %v421 = vmul.f32 %v420, 0.6931472
        %v422 = vmax.f32 %v419, -100.0
        %v423 = vmax.f32 %v421, -100.0
        %v424 = vsub.f32 0.0, %v422
        %v425 = vsub.f32 0.0, %v423
        %v426 = vadd.f32 %v412, %v413
        %v427 = vadd.f32 %v424, %v425
        %v428 = vadd.f32 %v380, %v381
        %v429 = vadd.f32 %v396, %v397
        %v430 = vmul.f32 %v380, %v396
        %v431 = vmul.f32 %v381, %v397
        %v432 = vadd.f32 %v430, %v431
        %v433 = vadd.f32 %v382, %v383
        %v434 = vadd.f32 %v400, %v401
        %v435 = vmul.f32 %v382, %v400
        %v436 = vmul.f32 %v383, %v401
        %v437 = vadd.f32 %v435, %v436
        %v438 = vld [vmem:[%s361] sm:$0xff]
        %v439 = vld [vmem:[%s361 + $0x8] sm:$0xff]
        %v440 = vld [vmem:[%s361 + $0x10] sm:$0xff]
        %v441 = vld [vmem:[%s361 + $0x18] sm:$0xff]
        %v442 = vld [vmem:[%s361 + $0x20] sm:$0xff]
        %v443 = vld [vmem:[%s361 + $0x28] sm:$0xff]
        %v444 = vld [vmem:[%s361 + $0x30] sm:$0xff]
        %v445 = vld [vmem:[%s361 + $0x38] sm:$0xff]
        %v446 = vadd.f32 %v438, %v426
        %v447 = vadd.f32 %v439, %v427
        %v448 = vadd.f32 %v440, %v428
        %v449 = vadd.f32 %v441, %v429
        %v450 = vadd.f32 %v442, %v432
        %v451 = vadd.f32 %v443, %v433
        %v452 = vadd.f32 %v444, %v434
        %v453 = vadd.f32 %v445, %v437
        %454 = vst [vmem:[%s361] sm:$0xff] %v446
        %455 = vst [vmem:[%s361 + $0x8] sm:$0xff] %v447
        %456 = vst [vmem:[%s361 + $0x10] sm:$0xff] %v448
        %457 = vst [vmem:[%s361 + $0x18] sm:$0xff] %v449
        %458 = vst [vmem:[%s361 + $0x20] sm:$0xff] %v450
        %459 = vst [vmem:[%s361 + $0x28] sm:$0xff] %v451
        %460 = vst [vmem:[%s361 + $0x30] sm:$0xff] %v452
        %461 = vst [vmem:[%s361 + $0x38] sm:$0xff] %v453
      $region44: #{dice_ce_loss.1} parent=35 // pred_fallthru
        _
      %s462 = smul.u32 8, %s19
      %p463 = scmp.lt.s32.totalorder %s462, 15
      %s464 = scalar_select %p463, %s462, 15
      %s465 = smul.addr %s464, 8
      %s466 = scalar_lea.vmem %s4, %s465
      // Predicated region
      $region45: #{dice_ce_loss.1} parent=35 // pred_check
        %p467 = pneg %p173
      $region46: #{dice_ce_loss.1} parent=35 // pred_check_branch
        %469 = sbr.rel (%p467) target = $region48
      $region47: #{dice_ce_loss.1} parent=35 // pred_region
        %s470 = smul.u32 8, %s19
      $region48: #{dice_ce_loss.1} parent=35 // pred_fallthru
        _
    $region36: #{dice_ce_loss.1} parent=5 // pred_fallthru
      _
    %p471 = scmp.le.s32.totalorder 2, %s10
    // Predicated region
    $region49: #{dice_ce_loss.1} parent=5 // pred_check
      %p472 = pneg %p471
    $region50: #{dice_ce_loss.1} parent=5 // pred_check_branch
      %474 = sbr.rel (%p472) target = $region52
    $region51: #{dice_ce_loss.1} parent=5 // pred_region
      %s475 = ssub.s32 %s10, 2
      // Predicated region
      $region53: #{dice_ce_loss.1} parent=51 // pred_check
        %p476 = pneg %p179
      $region54: #{dice_ce_loss.1} parent=51 // pred_check_branch
        %478 = sbr.rel (%p476) target = $region56
      $region55: #{dice_ce_loss.1} parent=51 // pred_region
        %s479 = smul.u32 8, %s21
        %p480 = scmp.lt.s32.totalorder %s479, 15
        %s481 = scalar_select %p480, %s479, 15
        %s482 = smul.addr %s481, 8
        %s483 = scalar_lea.vmem %s4, %s482
      $region56: #{dice_ce_loss.1} parent=51 // pred_fallthru
        _
    $region52: #{dice_ce_loss.1} parent=5 // pred_fallthru
      _
  $region6: #{dice_ce_loss.1} parent=0 // loop_footer
    %s14 = sadd.s32 1, %s10
  $region7: #{dice_ce_loss.1} parent=0 // loop_footer_branch
    %9 = sbr.rel target = $region3
  $region8: #{dice_ce_loss.1} parent=0 // loop_exit
    _

</llo_original>
